<compile_context>
chip_gen: v7x
topology: tpu7x:2x2x1
jax: 0.10.0
libtpu: 0.0.40
codegen_flags: <defaults>
</compile_context>

<pallas_src>
import functools

import jax
import jax.numpy as jnp
from jax.experimental import pallas as pl
from jax.experimental.pallas import tpu as pltpu


def _conv3x3_s2_kernel(x_ref, w_ref, o_ref, *, m, wo):
    """Fused 3x3 / stride-2 conv for one image.

    x_ref: (2, S, 3*Cin)        bf16  row-parity strips (col-taps concat on channels)
    w_ref: (3, 3*Cin, Cout)     bf16  per-kernel-row weight slabs, VMEM-resident
    o_ref: (M, Cout)            f32   lane-dense output (Cout = 128)
    """
    xa = x_ref[0]                                  # parity-0 strip (S, 3*Cin)
    xb = x_ref[1]                                  # parity-1 strip (S, 3*Cin)
    # Kernel row r = 0: even padded rows, no row shift.
    p0 = jnp.dot(xa, w_ref[0], preferred_element_type=jnp.float32)
    # Kernel row r = 1: odd padded rows, no row shift.
    p1 = jnp.dot(xb, w_ref[1], preferred_element_type=jnp.float32)
    # Kernel row r = 2: even padded rows, shifted down by one output row (Wo).
    p2 = jnp.dot(xa, w_ref[2], preferred_element_type=jnp.float32)
    # Slices are f32 and start at multiples of 8 rows -> sublane aligned.
    o_ref[...] = p0[:m, :] + p1[:m, :] + p2[wo:wo + m, :]


def prepare_conv_weight(weight_oihw, compute_dtype=jnp.bfloat16):
    """OIHW -> (KH, KW*Cin, Cout).  Do once at parameter-load time."""
    cout, cin, kh, kw = weight_oihw.shape
    w = jnp.transpose(weight_oihw, (2, 3, 1, 0))            # (KH, KW, Cin, Cout)
    return w.reshape(kh, kw * cin, cout).astype(compute_dtype)


def simplenet_forward(x_nchw, w_slabs, *, kh=3, kw=3, stride=2, padding=1,
                      compute_dtype=jnp.bfloat16):
    N, Cin, H, W = x_nchw.shape
    kh_w, kcin, Cout = w_slabs.shape
    assert kh_w == kh and kcin == kw * Cin
    # The module fixes 3x3 / stride 2 / pad 1; even spatial dims keep strips uniform.
    assert kh == 3 and kw == 3 and stride == 2 and padding == 1
    assert H % 2 == 0 and W % 2 == 0

    Ho = (H + 2 * padding - kh) // stride + 1
    Wo = (W + 2 * padding - kw) // stride + 1
    M = Ho * Wo                      # output rows per image
    S = (Ho + 1) * Wo                # strip rows per image (one extra output row)

    # ---- light layout prep in XLA (single pass, no 2.25x im2col) ----
    x = jnp.transpose(x_nchw, (0, 2, 3, 1)).astype(compute_dtype)      # NHWC bf16
    xp = jnp.pad(x, ((0, 0), (padding, padding), (padding, padding), (0, 0)))
    strips = []
    for parity in range(2):                                  # padded-row parity
        rows = xp[:, parity:parity + 2 * Ho + 1:2, :, :]     # (N, Ho+1, W+2, Cin)
        taps = [rows[:, :, c:c + 2 * Wo - 1:2, :] for c in range(kw)]
        strips.append(jnp.concatenate(taps, axis=-1).reshape(N, S, kw * Cin))
    x2 = jnp.stack(strips, axis=1).reshape(N * 2, S, kw * Cin)   # (N*2, S, 3*Cin)

    kernel = functools.partial(_conv3x3_s2_kernel, m=M, wo=Wo)

    itemsize = jnp.dtype(compute_dtype).itemsize
    cost = pl.CostEstimate(
        flops=2 * N * M * (kh * kw * Cin) * Cout,
        transcendentals=0,
        bytes_accessed=int(x2.size * itemsize + w_slabs.size * itemsize
                           + N * M * Cout * 4),
    )

    out = pl.pallas_call(
        kernel,
        out_shape=jax.ShapeDtypeStruct((N * M, Cout), jnp.float32),
        grid_spec=pltpu.PrefetchScalarGridSpec(
            num_scalar_prefetch=0,
            grid=(N,),
            in_specs=[
                pl.BlockSpec((2, S, kw * Cin), lambda n: (n, 0, 0)),
                pl.BlockSpec((kh, kw * Cin, Cout), lambda n: (0, 0, 0)),
            ],
            out_specs=pl.BlockSpec((M, Cout), lambda n: (n, 0)),
        ),
        compiler_params=pltpu.CompilerParams(
            dimension_semantics=("parallel",),
        ),
        cost_estimate=cost,
    )(x2, w_slabs)

    # Back to NCHW then torch.flatten(start_dim=1): one fused XLA transpose.
    y = out.reshape(N, Ho, Wo, Cout).transpose(0, 3, 1, 2).reshape(N, Cout * Ho * Wo)
    return y


if __name__ == "__main__":
    key = jax.random.PRNGKey(0)
    kx, kwt = jax.random.split(key)

    # The module fixes Cin=64, Cout=128; small batch/spatial for the test.
    N, Cin, H, W = 2, 64, 16, 16
    Cout, KH, KW = 128, 3, 3

    x = jax.random.normal(kx, (N, Cin, H, W), dtype=jnp.float32)
    fan_in = Cin * KH * KW
    weight = jax.random.normal(kwt, (Cout, Cin, KH, KW), dtype=jnp.float32) / jnp.sqrt(
        jnp.float32(fan_in)
    )

    w_slabs = prepare_conv_weight(weight)      # hoisted: done once, not per call
    fwd = jax.jit(simplenet_forward)

    y = jax.block_until_ready(fwd(x, w_slabs))

    # Reference: f32 XLA conv (same semantics as torch Conv2d + flatten).
    ref = jax.lax.conv_general_dilated(
        x, weight, window_strides=(2, 2), padding=((1, 1), (1, 1)),
        dimension_numbers=("NCHW", "OIHW", "NCHW"),
    ).reshape(N, -1)

    assert y.shape == (N, Cout * (H // 2) * (W // 2)), y.shape
    # bf16 MXU operands with f32 accumulation -> bf16-level tolerance vs f32 ref.
    err = float(jnp.max(jnp.abs(y - ref)))
    assert jnp.allclose(y, ref, atol=3e-2, rtol=3e-2), err

    print("KERNEL_OK")
</pallas_src>

<mosaic_0001>
module attributes {stable_mosaic.version = 11 : i64} {
  func.func @_conv3x3_s2_kernel(%arg0: i32, %arg1: memref<2x72x192xbf16, #tpu.memory_space<vmem>>, %arg2: memref<3x192x128xbf16, #tpu.memory_space<vmem>>, %arg3: memref<64x128xf32, #tpu.memory_space<vmem>>) attributes {dimension_semantics = [#tpu.dimension_semantics<parallel>], iteration_bounds = array<i64: 2>, scalar_prefetch = 0 : i64, scratch_operands = 0 : i64, tpu.core_type = #tpu.core_type<tc>, window_params = [{transform_indices = @transform_0, window_bounds = array<i64: 2, 72, 192>}, {pipeline_mode = #tpu.pipeline_mode<synchronous>, transform_indices = @transform_1, window_bounds = array<i64: 3, 192, 128>}, {transform_indices = @transform_2, window_bounds = array<i64: 64, 128>}]} {
    %c0 = arith.constant 0 : index
    %c0_0 = arith.constant 0 : index
    %c0_1 = arith.constant 0 : index
    %0 = vector.load %arg1[%c0, %c0_0, %c0_1] : memref<2x72x192xbf16, #tpu.memory_space<vmem>>, vector<1x72x192xbf16>
    %1 = vector.shape_cast %0 : vector<1x72x192xbf16> to vector<72x192xbf16>
    %c1 = arith.constant 1 : index
    %c0_2 = arith.constant 0 : index
    %c0_3 = arith.constant 0 : index
    %2 = vector.load %arg1[%c1, %c0_2, %c0_3] : memref<2x72x192xbf16, #tpu.memory_space<vmem>>, vector<1x72x192xbf16>
    %3 = vector.shape_cast %2 : vector<1x72x192xbf16> to vector<72x192xbf16>
    %c0_4 = arith.constant 0 : index
    %c0_5 = arith.constant 0 : index
    %c0_6 = arith.constant 0 : index
    %4 = vector.load %arg2[%c0_4, %c0_5, %c0_6] : memref<3x192x128xbf16, #tpu.memory_space<vmem>>, vector<1x192x128xbf16>
    %5 = vector.shape_cast %4 : vector<1x192x128xbf16> to vector<192x128xbf16>
    %cst = arith.constant dense<0.000000e+00> : vector<72x128xf32>
    %6 = tpu.matmul %1, %5, %cst {dimension_numbers = #tpu.dot_dimension_numbers<[1], [0], [0], [1], [0, 0, 1, 1], [], []>} : vector<72x192xbf16>, vector<192x128xbf16>, vector<72x128xf32> -> vector<72x128xf32>
    %c1_7 = arith.constant 1 : index
    %c0_8 = arith.constant 0 : index
    %c0_9 = arith.constant 0 : index
    %7 = vector.load %arg2[%c1_7, %c0_8, %c0_9] : memref<3x192x128xbf16, #tpu.memory_space<vmem>>, vector<1x192x128xbf16>
    %8 = vector.shape_cast %7 : vector<1x192x128xbf16> to vector<192x128xbf16>
    %cst_10 = arith.constant dense<0.000000e+00> : vector<72x128xf32>
    %9 = tpu.matmul %3, %8, %cst_10 {dimension_numbers = #tpu.dot_dimension_numbers<[1], [0], [0], [1], [0, 0, 1, 1], [], []>} : vector<72x192xbf16>, vector<192x128xbf16>, vector<72x128xf32> -> vector<72x128xf32>
    %c2 = arith.constant 2 : index
    %c0_11 = arith.constant 0 : index
    %c0_12 = arith.constant 0 : index
    %10 = vector.load %arg2[%c2, %c0_11, %c0_12] : memref<3x192x128xbf16, #tpu.memory_space<vmem>>, vector<1x192x128xbf16>
    %11 = vector.shape_cast %10 : vector<1x192x128xbf16> to vector<192x128xbf16>
    %cst_13 = arith.constant dense<0.000000e+00> : vector<72x128xf32>
    %12 = tpu.matmul %1, %11, %cst_13 {dimension_numbers = #tpu.dot_dimension_numbers<[1], [0], [0], [1], [0, 0, 1, 1], [], []>} : vector<72x192xbf16>, vector<192x128xbf16>, vector<72x128xf32> -> vector<72x128xf32>
    %13 = vector.extract_strided_slice %6 {offsets = [0, 0], sizes = [64, 128], strides = [1, 1]} : vector<72x128xf32> to vector<64x128xf32>
    %14 = vector.extract_strided_slice %9 {offsets = [0, 0], sizes = [64, 128], strides = [1, 1]} : vector<72x128xf32> to vector<64x128xf32>
    %15 = arith.addf %13, %14 : vector<64x128xf32>
    %16 = vector.extract_strided_slice %12 {offsets = [8, 0], sizes = [64, 128], strides = [1, 1]} : vector<72x128xf32> to vector<64x128xf32>
    %17 = arith.addf %15, %16 : vector<64x128xf32>
    %c0_14 = arith.constant 0 : index
    %c0_15 = arith.constant 0 : index
    %18 = vector.load %arg3[%c0_14, %c0_15] : memref<64x128xf32, #tpu.memory_space<vmem>>, vector<64x128xf32>
    tpu.vector_store %arg3[%c0_14, %c0_15], %17 {strides = array<i32>} : memref<64x128xf32, #tpu.memory_space<vmem>>, vector<64x128xf32>,
    return
  }
  func.func @transform_0(%arg0: i32) -> (i32, i32, i32) {
    %c0_i32 = arith.constant 0 : i32
    %c0_i32_0 = arith.constant 0 : i32
    %c0_i32_1 = arith.constant 0 : i32
    return %arg0, %c0_i32, %c0_i32_0 : i32, i32, i32
  }
  func.func @transform_1(%arg0: i32) -> (i32, i32, i32) {
    %c0_i32 = arith.constant 0 : i32
    %c0_i32_0 = arith.constant 0 : i32
    %c0_i32_1 = arith.constant 0 : i32
    %c0_i32_2 = arith.constant 0 : i32
    return %c0_i32, %c0_i32_0, %c0_i32_1 : i32, i32, i32
  }
  func.func @transform_2(%arg0: i32) -> (i32, i32) {
    %c0_i32 = arith.constant 0 : i32
    %c0_i32_0 = arith.constant 0 : i32
    return %arg0, %c0_i32 : i32, i32
  }
}

</mosaic_0001>

<llo_original>
// kernel: simplenet_forward.1
$region0: #{simplenet_forward.1}
  #allocation0 [shape = 'u32[]', space=smem, size = 0x4, offset = 0x4, fixed_abs, tag = 'smem constant byte address 0x4 - core index']
  #allocation1 [shape = 'u32[144,128]{1,0:T(1,128)}', space=vmem, size = 0x12000, scoped, tag = 'internal scratch']
  %s0 = inlined_call_operand.vmem [shape: bf16[4,72,192], index: 0, kind: input, shape index: {}]
  %s1 = inlined_call_operand.vmem [shape: bf16[3,192,128], index: 1, kind: input, shape index: {}]
  %s2 = inlined_call_operand.vmem [shape: f32[128,128], index: 2, kind: output, shape index: {}]
  %s3 = sld [smem:[#allocation0]]
  $region41: #{simplenet_forward.1} parent=0
    _
  %s5 = ssub.s32 1, %s3
  %s6 = scalar_select 0, %s5, %s3
  loop: start=0, step=1, limit=4
  $region2: #{simplenet_forward.1} parent=0 // loop_pre_header
    _
  $region3: #{simplenet_forward.1} parent=0 // loop_header
    %s8 = sphi 0, %s12
    %p9 = scmp.ge.s32.totalorder %s8, 4
    %s18 = sphi 0, %s20
    %s21 = sphi 0, %s18
    %s22 = sphi 0, %s21
    %s38 = sphi 0, %s22
    %s42 = sphi 0, %s42
    %s44 = sphi 0, %s42
    %s45 = sphi 0, %s44
    %s59 = sphi 0, %s45
    %s65 = sphi 0, %s67
    %s68 = sphi 0, %s65
    %s69 = sphi 0, %s68
    %s85 = sphi 0, %s69
  $region4: #{simplenet_forward.1} parent=0 // loop_header_branch
    %11 = sbr.rel (%p9) target = $region8
  $region5: #{simplenet_forward.1} parent=0 // loop_body
    %s13 = ssub.s32 %s8, 1
    %s14 = ssub.s32 %s8, 2
    %s15 = sadd.s32 %s8, 1
    %s16 = ssub.s32 %s8, %s15
    %p17 = scmp.eq.s32.totalorder %s16, 0
    %s19 = sadd.s32 %s18, 1
    %s20 = scalar_select %p17, %s18, %s19
    %p23 = pneg %p17
    %p24 = scmp.eq.s32.totalorder %s8, 1
    %p25 = por %p23, %p24
    %p26 = scmp.ne.s32.totalorder %s18, %s21
    %p27 = scmp.eq.s32.totalorder %s8, 0
    %p28 = por %p26, %p27
    %p29 = scmp.ne.s32.totalorder %s18, %s21
    %p30 = scmp.eq.s32.totalorder %s13, 1
    %p31 = por %p29, %p30
    %p32 = scmp.ne.s32.totalorder %s21, %s22
    %p33 = scmp.eq.s32.totalorder %s13, 0
    %p34 = por %p32, %p33
    %p35 = scmp.ne.s32.totalorder %s21, %s22
    %p36 = scmp.eq.s32.totalorder %s14, 1
    %p37 = por %p35, %p36
    %p39 = scmp.ne.s32.totalorder %s22, %s38
    %p40 = scmp.eq.s32.totalorder %s14, 0
    %p41 = por %p39, %p40
    %s43 = sadd.s32 %s42, 1
    %p46 = scmp.eq.s32.totalorder %s8, 1
    %p47 = scmp.ne.s32.totalorder %s42, %s44
    %p48 = scmp.eq.s32.totalorder %s8, 0
    %p49 = por %p47, %p48
    %p50 = scmp.ne.s32.totalorder %s42, %s44
    %p51 = scmp.eq.s32.totalorder %s13, 1
    %p52 = por %p50, %p51
    %p53 = scmp.ne.s32.totalorder %s44, %s45
    %p54 = scmp.eq.s32.totalorder %s13, 0
    %p55 = por %p53, %p54
    %p56 = scmp.ne.s32.totalorder %s44, %s45
    %p57 = scmp.eq.s32.totalorder %s14, 1
    %p58 = por %p56, %p57
    %p60 = scmp.ne.s32.totalorder %s45, %s59
    %p61 = scmp.eq.s32.totalorder %s14, 0
    %p62 = por %p60, %p61
    %s63 = ssub.s32 %s8, %s15
    %p64 = scmp.eq.s32.totalorder %s63, 0
    %s66 = sadd.s32 %s65, 1
    %s67 = scalar_select %p64, %s65, %s66
    %p70 = pneg %p64
    %p71 = scmp.eq.s32.totalorder %s8, 1
    %p72 = por %p70, %p71
    %p73 = scmp.ne.s32.totalorder %s65, %s68
    %p74 = scmp.eq.s32.totalorder %s8, 0
    %p75 = por %p73, %p74
    %p76 = scmp.ne.s32.totalorder %s65, %s68
    %p77 = scmp.eq.s32.totalorder %s13, 1
    %p78 = por %p76, %p77
    %p79 = scmp.ne.s32.totalorder %s68, %s69
    %p80 = scmp.eq.s32.totalorder %s13, 0
    %p81 = por %p79, %p80
    %p82 = scmp.ne.s32.totalorder %s68, %s69
    %p83 = scmp.eq.s32.totalorder %s14, 1
    %p84 = por %p82, %p83
    %p86 = scmp.ne.s32.totalorder %s69, %s85
    %p87 = scmp.eq.s32.totalorder %s14, 0
    %p88 = por %p86, %p87
    %p89 = scmp.le.s32.totalorder 1, %s8
    %p90 = scmp.lt.s32.totalorder %s8, 3
    %p91 = pnand %p89, %p90
    %p92 = pneg %p91
    // Predicated region
    $region9: #{simplenet_forward.1} parent=5 // pred_check
      _
    $region10: #{simplenet_forward.1} parent=5 // pred_check_branch
      %94 = sbr.rel (%p91) target = $region12
    $region11: #{simplenet_forward.1} parent=5 // pred_region
      %s95 = ssub.s32 %s8, 1
      // Predicated region
      $region13: #{simplenet_forward.1} parent=11 // pred_check
        %p96 = pneg %p55
      $region14: #{simplenet_forward.1} parent=11 // pred_check_branch
        %98 = sbr.rel (%p96) target = $region16
      $region15: #{simplenet_forward.1} parent=11 // pred_region
        _
      $region16: #{simplenet_forward.1} parent=11 // pred_fallthru
        _
    $region12: #{simplenet_forward.1} parent=5 // pred_fallthru
      _
    %p99 = scmp.lt.s32.totalorder %s8, 2
    // Predicated region
    $region17: #{simplenet_forward.1} parent=5 // pred_check
      %p100 = pneg %p99
    $region18: #{simplenet_forward.1} parent=5 // pred_check_branch
      %102 = sbr.rel (%p100) target = $region20
    $region19: #{simplenet_forward.1} parent=5 // pred_region
      // Predicated region
      $region21: #{simplenet_forward.1} parent=19 // pred_check
        %p103 = pneg %p28
      $region22: #{simplenet_forward.1} parent=19 // pred_check_branch
        %105 = sbr.rel (%p103) target = $region24
      $region23: #{simplenet_forward.1} parent=19 // pred_region
        %s106 = smul.u32 2, %s8
        %p107 = scmp.lt.s32.totalorder %s106, 3
        %s108 = scalar_select %p107, %s106, 3
        %s109 = smul.addr %s108, 18
        %s110 = smul.addr %s109, 4
        %s111 = scalar_lea.vmem %s0, %s110
        %s112 = smul.u32 2, %s8
      $region24: #{simplenet_forward.1} parent=19 // pred_fallthru
        _
    $region20: #{simplenet_forward.1} parent=5 // pred_fallthru
      _
    %p113 = scmp.le.s32.totalorder 1, %s8
    %p114 = scmp.lt.s32.totalorder %s8, 3
    %p115 = pnand %p113, %p114
    %p116 = pneg %p115
    // Predicated region
    $region25: #{simplenet_forward.1} parent=5 // pred_check
      _
    $region26: #{simplenet_forward.1} parent=5 // pred_check_branch
      %118 = sbr.rel (%p115) target = $region28
    $region27: #{simplenet_forward.1} parent=5 // pred_region
      %s119 = ssub.s32 %s8, 1
      %s120 = smul.u32 2, %s13
      %p121 = scmp.lt.s32.totalorder %s120, 3
      %s122 = scalar_select %p121, %s120, 3
      %s123 = smul.addr %s122, 18
      %s124 = smul.addr %s123, 4
      %s125 = scalar_lea.vmem %s0, %s124
      %p126 = pneg %p34
      %p127 = pneg %p31
      %p128 = pneg %p55
      %p129 = pneg %p52
      %p130 = pneg %p81
      %p131 = pneg %p78
      %s132 = smul.u32 8, %s13
      %p133 = scmp.lt.s32.totalorder %s132, 15
      %s134 = scalar_select %p133, %s132, 15
      %s135 = smul.addr %s134, 8
      %s136 = scalar_lea.vmem %s2, %s135
      %s137 = smul.u32 2, %s13
      %p138 = scmp.lt.s32.totalorder %s137, 3
      %s139 = scalar_select %p138, %s137, 3
      %s140 = smul.addr %s139, 18
      %s141 = smul.addr %s140, 4
      %s142 = scalar_lea.vmem %s0, %s141
      %s143 = smul.u32 2, %s13
      %s144 = smul.u32 8, %s13
      %p145 = scmp.lt.s32.totalorder %s144, 15
      %s146 = scalar_select %p145, %s144, 15
      %s147 = smul.addr %s146, 8
      %s148 = scalar_lea.vmem %s2, %s147
      %s149 = smul.u32 8, %s13
      %v151 = vld [vmem:[%s142] sm:$0xff]
      %v152 = vld [vmem:[%s142 + $0x8] sm:$0xff]
      %v153 = vld [vmem:[%s142 + $0x10] sm:$0xff]
      %v154 = vld [vmem:[%s142 + $0x18] sm:$0xff]
      %v155 = vld [vmem:[%s142 + $0x20] sm:$0xff]
      %v156 = vld [vmem:[%s142 + $0x28] sm:$0xff]
      %v157 = vld [vmem:[%s142 + $0x30] sm:$0xff]
      %v158 = vld [vmem:[%s142 + $0x38] sm:$0xff]
      %v159 = vld [vmem:[%s142 + $0x40] sm:$0xff]
      %s160 = scalar_lea.vmem %s142, 72
      %v161 = vld [vmem:[%s160] sm:$0xff]
      %v162 = vld [vmem:[%s160 + $0x8] sm:$0xff]
      %v163 = vld [vmem:[%s160 + $0x10] sm:$0xff]
      %v164 = vld [vmem:[%s160 + $0x18] sm:$0xff]
      %v165 = vld [vmem:[%s160 + $0x20] sm:$0xff]
      %v166 = vld [vmem:[%s160 + $0x28] sm:$0xff]
      %v167 = vld [vmem:[%s160 + $0x30] sm:$0xff]
      %v168 = vld [vmem:[%s160 + $0x38] sm:$0xff]
      %v169 = vld [vmem:[%s160 + $0x40] sm:$0xff]
      %v170 = vld [vmem:[%s1] sm:$0xf]
      %v171 = vld [vmem:[%s1 + $0x4] sm:$0xf]
      %v172 = vld [vmem:[%s1 + $0x8] sm:$0xf]
      %v173 = vld [vmem:[%s1 + $0xc] sm:$0xf]
      %v174 = vld [vmem:[%s1 + $0x10] sm:$0xf]
      %v175 = vld [vmem:[%s1 + $0x14] sm:$0xf]
      %v176 = vld [vmem:[%s1 + $0x18] sm:$0xf]
      %v177 = vld [vmem:[%s1 + $0x1c] sm:$0xf]
      %v178 = vld [vmem:[%s1 + $0x20] sm:$0xf]
      %v179 = vld [vmem:[%s1 + $0x24] sm:$0xf]
      %v180 = vld [vmem:[%s1 + $0x28] sm:$0xf]
      %v181 = vld [vmem:[%s1 + $0x2c] sm:$0xf]
      %v182 = vld [vmem:[%s1 + $0x30] sm:$0xf]
      %v183 = vld [vmem:[%s1 + $0x34] sm:$0xf]
      %v184 = vld [vmem:[%s1 + $0x38] sm:$0xf]
      %v185 = vld [vmem:[%s1 + $0x3c] sm:$0xf]
      %v186 = vld [vmem:[%s1 + $0x40] sm:$0xf]
      %v187 = vld [vmem:[%s1 + $0x44] sm:$0xf]
      %v188 = vld [vmem:[%s1 + $0x48] sm:$0xf]
      %v189 = vld [vmem:[%s1 + $0x4c] sm:$0xf]
      %v190 = vld [vmem:[%s1 + $0x50] sm:$0xf]
      %v191 = vld [vmem:[%s1 + $0x54] sm:$0xf]
      %v192 = vld [vmem:[%s1 + $0x58] sm:$0xf]
      %v193 = vld [vmem:[%s1 + $0x5c] sm:$0xf]
      %v203 = vunpack.c.l.b16 %v151
      %v204 = vunpack.c.h.b16 %v151
      %v205 = vunpack.c.l.b16 %v152
      %v206 = vunpack.c.h.b16 %v152
      %v207 = vunpack.c.l.b16 %v153
      %v208 = vunpack.c.h.b16 %v153
      %v209 = vunpack.c.l.b16 %v154
      %v210 = vunpack.c.h.b16 %v154
      %v211 = vunpack.c.l.b16 %v155
      %v212 = vunpack.c.h.b16 %v155
      %v213 = vunpack.c.l.b16 %v156
      %v214 = vunpack.c.h.b16 %v156
      %v215 = vunpack.c.l.b16 %v157
      %v216 = vunpack.c.h.b16 %v157
      %v217 = vunpack.c.l.b16 %v158
      %v218 = vunpack.c.h.b16 %v158
      %v219 = vunpack.c.l.b16 %v159
      %v220 = vunpack.c.h.b16 %v159
      %v221 = vpack.c.b16 %v205, %v203
      %v222 = vpack.c.b16 %v206, %v204
      %v223 = vpack.c.b16 %v209, %v207
      %v224 = vpack.c.b16 %v210, %v208
      %v225 = vpack.c.b16 %v213, %v211
      %v226 = vpack.c.b16 %v214, %v212
      %v227 = vpack.c.b16 %v217, %v215
      %v228 = vpack.c.b16 %v218, %v216
      %v229 = vpack.c.b16 %v219, %v219
      %v230 = vpack.c.b16 %v220, %v220
      %v260 = vunpack.c.l.b16 %v170
      %v261 = vunpack.c.l.b16 %v171
      %v262 = vunpack.c.l.b16 %v172
      %v263 = vunpack.c.l.b16 %v173
      %v264 = vunpack.c.l.b16 %v174
      %v265 = vunpack.c.l.b16 %v175
      %v266 = vunpack.c.l.b16 %v176
      %v267 = vunpack.c.l.b16 %v177
      %v268 = vunpack.c.l.b16 %v178
      %v269 = vunpack.c.l.b16 %v179
      %v270 = vunpack.c.l.b16 %v180
      %v271 = vunpack.c.l.b16 %v181
      %v272 = vunpack.c.l.b16 %v182
      %v273 = vunpack.c.l.b16 %v183
      %v274 = vunpack.c.l.b16 %v184
      %v275 = vunpack.c.l.b16 %v185
      %v276 = vunpack.c.l.b16 %v186
      %v277 = vunpack.c.l.b16 %v187
      %v278 = vunpack.c.l.b16 %v188
      %v279 = vunpack.c.l.b16 %v189
      %v280 = vunpack.c.l.b16 %v190
      %v281 = vunpack.c.l.b16 %v191
      %v282 = vunpack.c.l.b16 %v192
      %v283 = vunpack.c.l.b16 %v193
      %v284 = vpack.c.b16 %v261, %v260
      %v285 = vpack.c.b16 %v263, %v262
      %v286 = vpack.c.b16 %v265, %v264
      %v287 = vpack.c.b16 %v267, %v266
      %v288 = vpack.c.b16 %v269, %v268
      %v289 = vpack.c.b16 %v271, %v270
      %v290 = vpack.c.b16 %v273, %v272
      %v291 = vpack.c.b16 %v275, %v274
      %v292 = vpack.c.b16 %v277, %v276
      %v293 = vpack.c.b16 %v279, %v278
      %v294 = vpack.c.b16 %v281, %v280
      %v295 = vpack.c.b16 %v283, %v282
      %vm308 = vcmask 523264
      %v310 = vsel %vm308, %v222, 0
      %v313 = vsel %vm308, %v224, 0
      %v316 = vsel %vm308, %v226, 0
      %v319 = vsel %vm308, %v228, 0
      %v322 = vsel %vm308, %v230, 0
      %324 = vmatprep.subr.bf16.mxu0 0
      %325 = vmatpush1.bf16.msra.mxu0 %v284
      %326 = vmatprep.subr.bf16.mxu0 0
      %327 = vmatpush1.bf16.msra.mxu0 %v285
      %328 = vmatprep.subr.bf16.mxu0 0
      %329 = vmatpush1.bf16.msra.mxu0 %v286
      %330 = vmatprep.subr.bf16.mxu0 0
      %331 = vmatpush1.bf16.msra.mxu0 %v287
      %332 = vmatprep.subr.bf16.mxu0 0
      %333 = vmatpush1.bf16.msra.mxu0 %v288
      %334 = vmatprep.subr.bf16.mxu0 0
      %335 = vmatpush1.bf16.msra.mxu0 %v289
      %336 = vmatprep.subr.bf16.mxu0 0
      %337 = vmatpush1.bf16.msra.mxu0 %v290
      %338 = vmatprep.subr.bf16.mxu0 0
      %339 = vmatpush1.bf16.msra.mxu0 %v291
      %340 = vmatprep.subr.bf16.mxu0 0
      %341 = vmatpush1.bf16.msra.mxu0 %v292
      %342 = vmatprep.subr.bf16.mxu0 0
      %343 = vmatpush1.bf16.msra.mxu0 %v293
      %344 = vmatprep.subr.bf16.mxu0 0
      %345 = vmatpush1.bf16.msra.mxu0 %v294
      %346 = vmatprep.subr.bf16.mxu0 0
      %347 = vmatpush1.bf16.msra.mxu0 %v295
      %348 = vmatprep.subr.bf16.mxu0 0
      %349 = vmatpush1.bf16.msra.mxu0 0
      %350 = vmatprep.subr.bf16.mxu0 0
      %351 = vmatpush1.bf16.msra.mxu0 0
      %352 = vmatprep.subr.bf16.mxu0 0
      %353 = vmatpush1.bf16.msra.mxu0 0
      %354 = vmatprep.subr.bf16.mxu0 0
      %355 = vmatpush1.bf16.msra.mxu0 0
      %356 = vmatprep.mubr.bf16.mxu0 %v310
      %357 = vmatmul.mubr.bf16.gmra.mrb[0].mxu0 %v221
      %v358 = vpop.f32.mrb[0].mxu0
      %v359 = vadd.f32 0.0, %v358
      %v360 = vpop.f32.mrb[0].mxu0
      %v361 = vpop.f32.mrb[0].mxu0
      %v362 = vadd.f32 0.0, %v361
      %v363 = vpop.f32.mrb[0].mxu0
      %364 = vmatprep.mubr.bf16.mxu0 %v313
      %365 = vmatmul.mubr.bf16.gmra.mrb[0].mxu0 %v223
      %v366 = vpop.f32.mrb[0].mxu0
      %v367 = vadd.f32 0.0, %v366
      %v368 = vpop.f32.mrb[0].mxu0
      %v369 = vpop.f32.mrb[0].mxu0
      %v370 = vadd.f32 0.0, %v369
      %v371 = vpop.f32.mrb[0].mxu0
      %372 = vmatprep.mubr.bf16.mxu0 %v316
      %373 = vmatmul.mubr.bf16.gmra.mrb[0].mxu0 %v225
      %v374 = vpop.f32.mrb[0].mxu0
      %v375 = vadd.f32 0.0, %v374
      %v376 = vpop.f32.mrb[0].mxu0
      %v377 = vpop.f32.mrb[0].mxu0
      %v378 = vadd.f32 0.0, %v377
      %v379 = vpop.f32.mrb[0].mxu0
      %380 = vmatprep.mubr.bf16.mxu0 %v319
      %381 = vmatmul.mubr.bf16.gmra.mrb[0].mxu0 %v227
      %v382 = vpop.f32.mrb[0].mxu0
      %v383 = vadd.f32 0.0, %v382
      %v384 = vpop.f32.mrb[0].mxu0
      %v385 = vpop.f32.mrb[0].mxu0
      %v386 = vadd.f32 0.0, %v385
      %v387 = vpop.f32.mrb[0].mxu0
      %388 = vmatprep.mubr.bf16.mxu0 %v322
      %389 = vmatmul.mubr.bf16.gmra.mrb[0].mxu0 %v229
      %v390 = vpop.f32.mrb[0].mxu0
      %v391 = vpop.f32.mrb[0].mxu0
      %v392 = vpop.f32.mrb[0].mxu0
      %v393 = vpop.f32.mrb[0].mxu0
      %394 = vdwg.mxu0
      %s395 = scalar_lea.vmem %s1, 96
      %v396 = vld [vmem:[%s395] sm:$0xf]
      %v397 = vld [vmem:[%s395 + $0x4] sm:$0xf]
      %v398 = vld [vmem:[%s395 + $0x8] sm:$0xf]
      %v399 = vld [vmem:[%s395 + $0xc] sm:$0xf]
      %v400 = vld [vmem:[%s395 + $0x10] sm:$0xf]
      %v401 = vld [vmem:[%s395 + $0x14] sm:$0xf]
      %v402 = vld [vmem:[%s395 + $0x18] sm:$0xf]
      %v403 = vld [vmem:[%s395 + $0x1c] sm:$0xf]
      %v404 = vld [vmem:[%s395 + $0x20] sm:$0xf]
      %v405 = vld [vmem:[%s395 + $0x24] sm:$0xf]
      %v406 = vld [vmem:[%s395 + $0x28] sm:$0xf]
      %v407 = vld [vmem:[%s395 + $0x2c] sm:$0xf]
      %v408 = vld [vmem:[%s395 + $0x30] sm:$0xf]
      %v409 = vld [vmem:[%s395 + $0x34] sm:$0xf]
      %v410 = vld [vmem:[%s395 + $0x38] sm:$0xf]
      %v411 = vld [vmem:[%s395 + $0x3c] sm:$0xf]
      %v412 = vld [vmem:[%s395 + $0x40] sm:$0xf]
      %v413 = vld [vmem:[%s395 + $0x44] sm:$0xf]
      %v414 = vld [vmem:[%s395 + $0x48] sm:$0xf]
      %v415 = vld [vmem:[%s395 + $0x4c] sm:$0xf]
      %v416 = vld [vmem:[%s395 + $0x50] sm:$0xf]
      %v417 = vld [vmem:[%s395 + $0x54] sm:$0xf]
      %v418 = vld [vmem:[%s395 + $0x58] sm:$0xf]
      %v419 = vld [vmem:[%s395 + $0x5c] sm:$0xf]
      %v429 = vunpack.c.l.b16 %v161
      %v430 = vunpack.c.h.b16 %v161
      %v431 = vunpack.c.l.b16 %v162
      %v432 = vunpack.c.h.b16 %v162
      %v433 = vunpack.c.l.b16 %v163
      %v434 = vunpack.c.h.b16 %v163
      %v435 = vunpack.c.l.b16 %v164
      %v436 = vunpack.c.h.b16 %v164
      %v437 = vunpack.c.l.b16 %v165
      %v438 = vunpack.c.h.b16 %v165
      %v439 = vunpack.c.l.b16 %v166
      %v440 = vunpack.c.h.b16 %v166
      %v441 = vunpack.c.l.b16 %v167
      %v442 = vunpack.c.h.b16 %v167
      %v443 = vunpack.c.l.b16 %v168
      %v444 = vunpack.c.h.b16 %v168
      %v445 = vunpack.c.l.b16 %v169
      %v446 = vunpack.c.h.b16 %v169
      %v447 = vpack.c.b16 %v431, %v429
      %v448 = vpack.c.b16 %v432, %v430
      %v449 = vpack.c.b16 %v435, %v433
      %v450 = vpack.c.b16 %v436, %v434
      %v451 = vpack.c.b16 %v439, %v437
      %v452 = vpack.c.b16 %v440, %v438
      %v453 = vpack.c.b16 %v443, %v441
      %v454 = vpack.c.b16 %v444, %v442
      %v455 = vpack.c.b16 %v445, %v445
      %v456 = vpack.c.b16 %v446, %v446
      %v486 = vunpack.c.l.b16 %v396
      %v487 = vunpack.c.l.b16 %v397
      %v488 = vunpack.c.l.b16 %v398
      %v489 = vunpack.c.l.b16 %v399
      %v490 = vunpack.c.l.b16 %v400
      %v491 = vunpack.c.l.b16 %v401
      %v492 = vunpack.c.l.b16 %v402
      %v493 = vunpack.c.l.b16 %v403
      %v494 = vunpack.c.l.b16 %v404
      %v495 = vunpack.c.l.b16 %v405
      %v496 = vunpack.c.l.b16 %v406
      %v497 = vunpack.c.l.b16 %v407
      %v498 = vunpack.c.l.b16 %v408
      %v499 = vunpack.c.l.b16 %v409
      %v500 = vunpack.c.l.b16 %v410
      %v501 = vunpack.c.l.b16 %v411
      %v502 = vunpack.c.l.b16 %v412
      %v503 = vunpack.c.l.b16 %v413
      %v504 = vunpack.c.l.b16 %v414
      %v505 = vunpack.c.l.b16 %v415
      %v506 = vunpack.c.l.b16 %v416
      %v507 = vunpack.c.l.b16 %v417
      %v508 = vunpack.c.l.b16 %v418
      %v509 = vunpack.c.l.b16 %v419
      %v510 = vpack.c.b16 %v487, %v486
      %v511 = vpack.c.b16 %v489, %v488
      %v512 = vpack.c.b16 %v491, %v490
      %v513 = vpack.c.b16 %v493, %v492
      %v514 = vpack.c.b16 %v495, %v494
      %v515 = vpack.c.b16 %v497, %v496
      %v516 = vpack.c.b16 %v499, %v498
      %v517 = vpack.c.b16 %v501, %v500
      %v518 = vpack.c.b16 %v503, %v502
      %v519 = vpack.c.b16 %v505, %v504
      %v520 = vpack.c.b16 %v507, %v506
      %v521 = vpack.c.b16 %v509, %v508
      %v535 = vsel %vm308, %v448, 0
      %v538 = vsel %vm308, %v450, 0
      %v541 = vsel %vm308, %v452, 0
      %v544 = vsel %vm308, %v454, 0
      %v547 = vsel %vm308, %v456, 0
      %549 = vmatprep.subr.bf16.mxu0 0
      %550 = vmatpush1.bf16.msra.mxu0 %v510
      %551 = vmatprep.subr.bf16.mxu0 0
      %552 = vmatpush1.bf16.msra.mxu0 %v511
      %553 = vmatprep.subr.bf16.mxu0 0
      %554 = vmatpush1.bf16.msra.mxu0 %v512
      %555 = vmatprep.subr.bf16.mxu0 0
      %556 = vmatpush1.bf16.msra.mxu0 %v513
      %557 = vmatprep.subr.bf16.mxu0 0
      %558 = vmatpush1.bf16.msra.mxu0 %v514
      %559 = vmatprep.subr.bf16.mxu0 0
      %560 = vmatpush1.bf16.msra.mxu0 %v515
      %561 = vmatprep.subr.bf16.mxu0 0
      %562 = vmatpush1.bf16.msra.mxu0 %v516
      %563 = vmatprep.subr.bf16.mxu0 0
      %564 = vmatpush1.bf16.msra.mxu0 %v517
      %565 = vmatprep.subr.bf16.mxu0 0
      %566 = vmatpush1.bf16.msra.mxu0 %v518
      %567 = vmatprep.subr.bf16.mxu0 0
      %568 = vmatpush1.bf16.msra.mxu0 %v519
      %569 = vmatprep.subr.bf16.mxu0 0
      %570 = vmatpush1.bf16.msra.mxu0 %v520
      %571 = vmatprep.subr.bf16.mxu0 0
      %572 = vmatpush1.bf16.msra.mxu0 %v521
      %573 = vmatprep.subr.bf16.mxu0 0
      %574 = vmatpush1.bf16.msra.mxu0 0
      %575 = vmatprep.subr.bf16.mxu0 0
      %576 = vmatpush1.bf16.msra.mxu0 0
      %577 = vmatprep.subr.bf16.mxu0 0
      %578 = vmatpush1.bf16.msra.mxu0 0
      %579 = vmatprep.subr.bf16.mxu0 0
      %580 = vmatpush1.bf16.msra.mxu0 0
      %581 = vmatprep.mubr.bf16.mxu0 %v535
      %582 = vmatmul.mubr.bf16.gmra.mrb[0].mxu0 %v447
      %v583 = vpop.f32.mrb[0].mxu0
      %v584 = vadd.f32 0.0, %v583
      %v585 = vpop.f32.mrb[0].mxu0
      %v586 = vpop.f32.mrb[0].mxu0
      %v587 = vadd.f32 0.0, %v586
      %v588 = vpop.f32.mrb[0].mxu0
      %589 = vmatprep.mubr.bf16.mxu0 %v538
      %590 = vmatmul.mubr.bf16.gmra.mrb[0].mxu0 %v449
      %v591 = vpop.f32.mrb[0].mxu0
      %v592 = vadd.f32 0.0, %v591
      %v593 = vpop.f32.mrb[0].mxu0
      %v594 = vpop.f32.mrb[0].mxu0
      %v595 = vadd.f32 0.0, %v594
      %v596 = vpop.f32.mrb[0].mxu0
      %597 = vmatprep.mubr.bf16.mxu0 %v541
      %598 = vmatmul.mubr.bf16.gmra.mrb[0].mxu0 %v451
      %v599 = vpop.f32.mrb[0].mxu0
      %v600 = vadd.f32 0.0, %v599
      %v601 = vpop.f32.mrb[0].mxu0
      %v602 = vpop.f32.mrb[0].mxu0
      %v603 = vadd.f32 0.0, %v602
      %v604 = vpop.f32.mrb[0].mxu0
      %605 = vmatprep.mubr.bf16.mxu0 %v544
      %606 = vmatmul.mubr.bf16.gmra.mrb[0].mxu0 %v453
      %v607 = vpop.f32.mrb[0].mxu0
      %v608 = vadd.f32 0.0, %v607
      %v609 = vpop.f32.mrb[0].mxu0
      %v610 = vpop.f32.mrb[0].mxu0
      %v611 = vadd.f32 0.0, %v610
      %v612 = vpop.f32.mrb[0].mxu0
      %613 = vmatprep.mubr.bf16.mxu0 %v547
      %614 = vmatmul.mubr.bf16.gmra.mrb[0].mxu0 %v455
      %v615 = vpop.f32.mrb[0].mxu0
      %v616 = vpop.f32.mrb[0].mxu0
      %v617 = vpop.f32.mrb[0].mxu0
      %v618 = vpop.f32.mrb[0].mxu0
      %619 = vdwg.mxu0
      %s620 = scalar_lea.vmem %s1, 192
      %v621 = vld [vmem:[%s620] sm:$0xf]
      %v622 = vld [vmem:[%s620 + $0x4] sm:$0xf]
      %v623 = vld [vmem:[%s620 + $0x8] sm:$0xf]
      %v624 = vld [vmem:[%s620 + $0xc] sm:$0xf]
      %v625 = vld [vmem:[%s620 + $0x10] sm:$0xf]
      %v626 = vld [vmem:[%s620 + $0x14] sm:$0xf]
      %v627 = vld [vmem:[%s620 + $0x18] sm:$0xf]
      %v628 = vld [vmem:[%s620 + $0x1c] sm:$0xf]
      %v629 = vld [vmem:[%s620 + $0x20] sm:$0xf]
      %v630 = vld [vmem:[%s620 + $0x24] sm:$0xf]
      %v631 = vld [vmem:[%s620 + $0x28] sm:$0xf]
      %v632 = vld [vmem:[%s620 + $0x2c] sm:$0xf]
      %v633 = vld [vmem:[%s620 + $0x30] sm:$0xf]
      %v634 = vld [vmem:[%s620 + $0x34] sm:$0xf]
      %v635 = vld [vmem:[%s620 + $0x38] sm:$0xf]
      %v636 = vld [vmem:[%s620 + $0x3c] sm:$0xf]
      %v637 = vld [vmem:[%s620 + $0x40] sm:$0xf]
      %v638 = vld [vmem:[%s620 + $0x44] sm:$0xf]
      %v639 = vld [vmem:[%s620 + $0x48] sm:$0xf]
      %v640 = vld [vmem:[%s620 + $0x4c] sm:$0xf]
      %v641 = vld [vmem:[%s620 + $0x50] sm:$0xf]
      %v642 = vld [vmem:[%s620 + $0x54] sm:$0xf]
      %v643 = vld [vmem:[%s620 + $0x58] sm:$0xf]
      %v644 = vld [vmem:[%s620 + $0x5c] sm:$0xf]
      %v669 = vunpack.c.l.b16 %v621
      %v670 = vunpack.c.l.b16 %v622
      %v671 = vunpack.c.l.b16 %v623
      %v672 = vunpack.c.l.b16 %v624
      %v673 = vunpack.c.l.b16 %v625
      %v674 = vunpack.c.l.b16 %v626
      %v675 = vunpack.c.l.b16 %v627
      %v676 = vunpack.c.l.b16 %v628
      %v677 = vunpack.c.l.b16 %v629
      %v678 = vunpack.c.l.b16 %v630
      %v679 = vunpack.c.l.b16 %v631
      %v680 = vunpack.c.l.b16 %v632
      %v681 = vunpack.c.l.b16 %v633
      %v682 = vunpack.c.l.b16 %v634
      %v683 = vunpack.c.l.b16 %v635
      %v684 = vunpack.c.l.b16 %v636
      %v685 = vunpack.c.l.b16 %v637
      %v686 = vunpack.c.l.b16 %v638
      %v687 = vunpack.c.l.b16 %v639
      %v688 = vunpack.c.l.b16 %v640
      %v689 = vunpack.c.l.b16 %v641
      %v690 = vunpack.c.l.b16 %v642
      %v691 = vunpack.c.l.b16 %v643
      %v692 = vunpack.c.l.b16 %v644
      %v693 = vpack.c.b16 %v670, %v669
      %v694 = vpack.c.b16 %v672, %v671
      %v695 = vpack.c.b16 %v674, %v673
      %v696 = vpack.c.b16 %v676, %v675
      %v697 = vpack.c.b16 %v678, %v677
      %v698 = vpack.c.b16 %v680, %v679
      %v699 = vpack.c.b16 %v682, %v681
      %v700 = vpack.c.b16 %v684, %v683
      %v701 = vpack.c.b16 %v686, %v685
      %v702 = vpack.c.b16 %v688, %v687
      %v703 = vpack.c.b16 %v690, %v689
      %v704 = vpack.c.b16 %v692, %v691
      %717 = vmatprep.subr.bf16.mxu0 0
      %718 = vmatpush1.bf16.msra.mxu0 %v693
      %719 = vmatprep.subr.bf16.mxu0 0
      %720 = vmatpush1.bf16.msra.mxu0 %v694
      %721 = vmatprep.subr.bf16.mxu0 0
      %722 = vmatpush1.bf16.msra.mxu0 %v695
      %723 = vmatprep.subr.bf16.mxu0 0
      %724 = vmatpush1.bf16.msra.mxu0 %v696
      %725 = vmatprep.subr.bf16.mxu0 0
      %726 = vmatpush1.bf16.msra.mxu0 %v697
      %727 = vmatprep.subr.bf16.mxu0 0
      %728 = vmatpush1.bf16.msra.mxu0 %v698
      %729 = vmatprep.subr.bf16.mxu0 0
      %730 = vmatpush1.bf16.msra.mxu0 %v699
      %731 = vmatprep.subr.bf16.mxu0 0
      %732 = vmatpush1.bf16.msra.mxu0 %v700
      %733 = vmatprep.subr.bf16.mxu0 0
      %734 = vmatpush1.bf16.msra.mxu0 %v701
      %735 = vmatprep.subr.bf16.mxu0 0
      %736 = vmatpush1.bf16.msra.mxu0 %v702
      %737 = vmatprep.subr.bf16.mxu0 0
      %738 = vmatpush1.bf16.msra.mxu0 %v703
      %739 = vmatprep.subr.bf16.mxu0 0
      %740 = vmatpush1.bf16.msra.mxu0 %v704
      %741 = vmatprep.subr.bf16.mxu0 0
      %742 = vmatpush1.bf16.msra.mxu0 0
      %743 = vmatprep.subr.bf16.mxu0 0
      %744 = vmatpush1.bf16.msra.mxu0 0
      %745 = vmatprep.subr.bf16.mxu0 0
      %746 = vmatpush1.bf16.msra.mxu0 0
      %747 = vmatprep.subr.bf16.mxu0 0
      %748 = vmatpush1.bf16.msra.mxu0 0
      %749 = vmatprep.mubr.bf16.mxu0 %v310
      %750 = vmatmul.mubr.bf16.gmra.mrb[0].mxu0 %v221
      %v751 = vpop.f32.mrb[0].mxu0
      %v752 = vpop.f32.mrb[0].mxu0
      %v753 = vpop.f32.mrb[0].mxu0
      %v754 = vadd.f32 0.0, %v753
      %v755 = vpop.f32.mrb[0].mxu0
      %756 = vmatprep.mubr.bf16.mxu0 %v313
      %757 = vmatmul.mubr.bf16.gmra.mrb[0].mxu0 %v223
      %v758 = vpop.f32.mrb[0].mxu0
      %v759 = vadd.f32 0.0, %v758
      %v760 = vpop.f32.mrb[0].mxu0
      %v761 = vpop.f32.mrb[0].mxu0
      %v762 = vadd.f32 0.0, %v761
      %v763 = vpop.f32.mrb[0].mxu0
      %764 = vmatprep.mubr.bf16.mxu0 %v316
      %765 = vmatmul.mubr.bf16.gmra.mrb[0].mxu0 %v225
      %v766 = vpop.f32.mrb[0].mxu0
      %v767 = vadd.f32 0.0, %v766
      %v768 = vpop.f32.mrb[0].mxu0
      %v769 = vpop.f32.mrb[0].mxu0
      %v770 = vadd.f32 0.0, %v769
      %v771 = vpop.f32.mrb[0].mxu0
      %772 = vmatprep.mubr.bf16.mxu0 %v319
      %773 = vmatmul.mubr.bf16.gmra.mrb[0].mxu0 %v227
      %v774 = vpop.f32.mrb[0].mxu0
      %v775 = vadd.f32 0.0, %v774
      %v776 = vpop.f32.mrb[0].mxu0
      %v777 = vpop.f32.mrb[0].mxu0
      %v778 = vadd.f32 0.0, %v777
      %v779 = vpop.f32.mrb[0].mxu0
      %780 = vmatprep.mubr.bf16.mxu0 %v322
      %781 = vmatmul.mubr.bf16.gmra.mrb[0].mxu0 %v229
      %v782 = vpop.f32.mrb[0].mxu0
      %v783 = vadd.f32 0.0, %v782
      %v784 = vpop.f32.mrb[0].mxu0
      %v785 = vpop.f32.mrb[0].mxu0
      %v786 = vpop.f32.mrb[0].mxu0
      %787 = vdwg.mxu0
      %v788 = vadd.f32 %v359, %v584
      %v789 = vadd.f32 %v362, %v587
      %v790 = vadd.f32 %v367, %v592
      %v791 = vadd.f32 %v370, %v595
      %v792 = vadd.f32 %v375, %v600
      %v793 = vadd.f32 %v378, %v603
      %v794 = vadd.f32 %v383, %v608
      %v795 = vadd.f32 %v386, %v611
      %v796 = vadd.f32 %v788, %v754
      %v797 = vadd.f32 %v789, %v759
      %v798 = vadd.f32 %v790, %v762
      %v799 = vadd.f32 %v791, %v767
      %v800 = vadd.f32 %v792, %v770
      %v801 = vadd.f32 %v793, %v775
      %v802 = vadd.f32 %v794, %v778
      %v803 = vadd.f32 %v795, %v783
      %804 = vst [vmem:[%s148] sm:$0xff] %v796
      %805 = vst [vmem:[%s148 + $0x8] sm:$0xff] %v797
      %806 = vst [vmem:[%s148 + $0x10] sm:$0xff] %v798
      %807 = vst [vmem:[%s148 + $0x18] sm:$0xff] %v799
      %808 = vst [vmem:[%s148 + $0x20] sm:$0xff] %v800
      %809 = vst [vmem:[%s148 + $0x28] sm:$0xff] %v801
      %810 = vst [vmem:[%s148 + $0x30] sm:$0xff] %v802
      %811 = vst [vmem:[%s148 + $0x38] sm:$0xff] %v803
      %s812 = smul.u32 8, %s13
      %p813 = scmp.lt.s32.totalorder %s812, 15
      %s814 = scalar_select %p813, %s812, 15
      %s815 = smul.addr %s814, 8
      %s816 = scalar_lea.vmem %s2, %s815
      // Predicated region
      $region29: #{simplenet_forward.1} parent=27 // pred_check
        %p817 = pneg %p78
      $region30: #{simplenet_forward.1} parent=27 // pred_check_branch
        %819 = sbr.rel (%p817) target = $region32
      $region31: #{simplenet_forward.1} parent=27 // pred_region
        %s820 = smul.u32 8, %s13
      $region32: #{simplenet_forward.1} parent=27 // pred_fallthru
        _
    $region28: #{simplenet_forward.1} parent=5 // pred_fallthru
      _
    %p821 = scmp.le.s32.totalorder 2, %s8
    // Predicated region
    $region33: #{simplenet_forward.1} parent=5 // pred_check
      %p822 = pneg %p821
    $region34: #{simplenet_forward.1} parent=5 // pred_check_branch
      %824 = sbr.rel (%p822) target = $region36
    $region35: #{simplenet_forward.1} parent=5 // pred_region
      %s825 = ssub.s32 %s8, 2
      // Predicated region
      $region37: #{simplenet_forward.1} parent=35 // pred_check
        %p826 = pneg %p84
      $region38: #{simplenet_forward.1} parent=35 // pred_check_branch
        %828 = sbr.rel (%p826) target = $region40
      $region39: #{simplenet_forward.1} parent=35 // pred_region
        %s829 = smul.u32 8, %s14
        %p830 = scmp.lt.s32.totalorder %s829, 15
        %s831 = scalar_select %p830, %s829, 15
        %s832 = smul.addr %s831, 8
        %s833 = scalar_lea.vmem %s2, %s832
      $region40: #{simplenet_forward.1} parent=35 // pred_fallthru
        _
    $region36: #{simplenet_forward.1} parent=5 // pred_fallthru
      _
  $region6: #{simplenet_forward.1} parent=0 // loop_footer
    %s12 = sadd.s32 1, %s8
  $region7: #{simplenet_forward.1} parent=0 // loop_footer_branch
    %7 = sbr.rel target = $region3
  $region8: #{simplenet_forward.1} parent=0 // loop_exit
    _

</llo_original>
